<compile_context>
chip_gen: v7x
topology: tpu7x:2x2x1
jax: 0.10.0
libtpu: 0.0.40
codegen_flags: <defaults>
</compile_context>

<pallas_src>
import functools

import jax
import jax.numpy as jnp
from jax import lax
from jax.experimental import pallas as pl
from jax.experimental.pallas import tpu as pltpu


def _round_up(a, b):
    return -(-a // b) * b


# ----------------------------------------------------------------------------
# Pallas kernel: grouped causal conv1d (cross-correlation, PyTorch semantics)
# ----------------------------------------------------------------------------
def _glm_filter_kernel(x_ref, w_ref, o_ref, xwin_ref, rhs_ref, *,
                       filter_len, halo_pad, carry_halo):
    """One (batch, c_out-block, time-tile) grid step.

    x_ref   : (1, C_in, TT)        current time tile of the input (compute dtype)
    w_ref   : (CO_BLK, L * C_in)   taps stacked along the contraction axis
    o_ref   : (1, CO_BLK, TT)      output tile
    xwin_ref: (C_in, PAD + TT)     persistent window; the causal halo (previous
                                   tile's last L-1 steps) lives in columns
                                   [PAD-(L-1), PAD); the tile at [PAD, PAD+TT)
    rhs_ref : (L * C_in, TT)       stacked shifted windows (fused matmul RHS)
    """
    L = filter_len
    PAD = halo_pad
    c_in = x_ref.shape[1]
    tt = o_ref.shape[2]

    if L > 1:
        t = pl.program_id(2)
        x_tile = x_ref[0]                                   # (C_in, TT)

        @pl.when(t == 0)
        def _():
            # first time tile of this (batch, c_out-block): zero causal history
            xwin_ref[:, :PAD] = jnp.zeros((c_in, PAD), xwin_ref.dtype)

        # lane-aligned full-tile store of the incoming tile at column PAD
        xwin_ref[:, PAD:] = x_tile

        win = xwin_ref[...]                                 # (C_in, PAD + TT)
        width = PAD + tt
        aligned = (width % 128 == 0) and (c_in % 8 == 0)
        for k in range(L):                                  # L is small & static
            s = (L - 1) - k                                 # history depth of tap k
            if s == 0:
                part = x_tile                               # aligned, no shift needed
            elif aligned:
                # XLU lane rotation + aligned offset-0 slice (VPU/vst slots stay free)
                part = pltpu.roll(win, shift=s, axis=1)[:, PAD:PAD + tt]
            else:
                part = win[:, PAD - s:PAD - s + tt]         # irregular-shape fallback
            rhs_ref[k * c_in:(k + 1) * c_in, :] = part

        if carry_halo:
            # carry the last L-1 columns of this tile as the next tile's halo
            xwin_ref[:, PAD - (L - 1):PAD] = x_tile[:, tt - (L - 1):]

        rhs = rhs_ref[...]                                  # (L*C_in, TT)
    else:
        rhs = x_ref[0]                                      # instantaneous filter only

    # single fused MXU pass over all taps; f32 accumulation; direct store
    o_ref[0] = jnp.dot(
        w_ref[...], rhs, preferred_element_type=jnp.float32
    ).astype(o_ref.dtype)


# ----------------------------------------------------------------------------
# wrapper helpers
# ----------------------------------------------------------------------------
def _stacked_blockdiag_weight(weight, conv_groups):
    """(C_out, C_in//G, L) grouped weights -> (C_out, L*C_in) stacked-tap matrix.

    Column block k*C_in:(k+1)*C_in holds the block-diagonal weight of tap k.
    """
    c_out, cin_g, L = weight.shape
    c_in = cin_g * conv_groups
    cout_g = c_out // conv_groups
    rows = jnp.arange(c_out)
    cols = (rows // cout_g)[:, None] * cin_g + jnp.arange(cin_g)[None, :]
    w_full = jnp.zeros((c_out, c_in, L), weight.dtype)
    w_full = w_full.at[rows[:, None], cols, :].set(weight)     # zeros off-diagonal
    # (C_out, C_in, L) -> (C_out, L, C_in) -> (C_out, L*C_in)
    return jnp.transpose(w_full, (0, 2, 1)).reshape(c_out, L * c_in)


def _vmem_working_set_bytes(c_in, c_out, L, tt, halo_pad, in_isz, out_isz):
    x_tile = 2 * c_in * tt * in_isz                        # double-buffered input tile
    o_tile = 2 * c_out * tt * out_isz                      # double-buffered output tile
    win = c_in * (halo_pad + tt) * in_isz if L > 1 else 8 * 128 * in_isz
    rhs = L * c_in * tt * in_isz if L > 1 else 8 * 128 * in_isz
    w = 2 * c_out * L * c_in * in_isz                      # resident stacked weights
    return x_tile + o_tile + win + rhs + w


def _choose_time_tile(T, c_in, c_out, L, in_isz, out_isz, tt_target, vmem_budget):
    """Largest 128-multiple tile dividing T within the VMEM working-set budget."""
    if T % 128 != 0 or T <= 128:
        return T
    halo_pad = _round_up(L - 1, 128) if L > 1 else 0

    def ws(tt):
        return _vmem_working_set_bytes(c_in, c_out, L, tt, halo_pad, in_isz, out_isz)

    cand = min(T, max(128, (tt_target // 128) * 128))
    while cand > 128 and (T % cand != 0 or ws(cand) > vmem_budget):
        cand -= 128
    return cand


# ----------------------------------------------------------------------------
# wrapper
# ----------------------------------------------------------------------------
def glm_filter_apply(x, weight, *, conv_groups, compute_dtype=jnp.bfloat16,
                     out_dtype=jnp.float32, time_tile=None, tt_target=2048,
                     num_cout_blocks=1, vmem_budget_bytes=24 * 1024 * 1024):
    """Apply the GLM coupling filter causally.

    x      : (N, C_in, T)                      NCW layout
    weight : (C_out, C_in // conv_groups, L)   last tap = instantaneous part
    returns: (N, C_out, T)                     `out_dtype` (f32 default; bf16
                                               halves output HBM traffic)

    The time tile is chosen from a VMEM working-set budget (same on
    v5e/v6e/v7x; the working set stays well under all scoped VMEM limits, so
    large tiles are kept on v7x too).  Activations stream in `compute_dtype`
    (bf16 default); accumulation is f32 on the MXU.  `num_cout_blocks > 1`
    adds a second parallel grid axis over output-channel blocks so both v7x
    TensorCores get work when the batch is small (requires the block size to
    be a multiple of 8).
    """
    N, c_in, T = x.shape
    c_out, cin_g, L = weight.shape
    if L <= 0:
        raise ValueError("Filter length must be bigger than zero")
    assert c_in == cin_g * conv_groups
    assert c_out % conv_groups == 0
    assert c_out % num_cout_blocks == 0
    co_blk = c_out // num_cout_blocks
    if num_cout_blocks > 1:
        assert co_blk % 8 == 0, "c_out blocks must be sublane-aligned (multiple of 8)"

    in_isz = jnp.dtype(compute_dtype).itemsize
    out_isz = jnp.dtype(out_dtype).itemsize
    halo_pad = _round_up(L - 1, 128) if L > 1 else 0

    tt = time_tile if time_tile is not None else _choose_time_tile(
        T, c_in, c_out, L, in_isz, out_isz, tt_target, vmem_budget_bytes)
    assert T % tt == 0
    nt = T // tt
    if nt > 1:
        assert tt >= L - 1, "time tile must cover the causal history"

    # Upstream should already supply bf16 to avoid this extra cast pass.
    x_c = x.astype(compute_dtype)
    w_stack = _stacked_blockdiag_weight(weight, conv_groups).astype(compute_dtype)

    kernel = functools.partial(_glm_filter_kernel, filter_len=L,
                               halo_pad=halo_pad, carry_halo=(nt > 1 and L > 1))

    win_shape = (c_in, halo_pad + tt) if L > 1 else (8, 128)
    rhs_shape = (L * c_in, tt) if L > 1 else (8, 128)

    ws = _vmem_working_set_bytes(c_in, c_out, L, tt, halo_pad, in_isz, out_isz)
    # explicit scoped-VMEM limit derived from the working set (review item);
    # capped below v7x's 64 MiB physical VMEM.
    vmem_limit = int(min(max(ws * 6 // 5 + (4 << 20), 32 << 20), 60 << 20))

    cost = pl.CostEstimate(
        flops=2 * N * c_out * cin_g * L * T,
        transcendentals=0,
        bytes_accessed=int(x_c.size) * in_isz + int(w_stack.size) * in_isz
                       + N * c_out * T * out_isz,
    )

    return pl.pallas_call(
        kernel,
        out_shape=jax.ShapeDtypeStruct((N, c_out, T), out_dtype),
        grid_spec=pltpu.PrefetchScalarGridSpec(
            num_scalar_prefetch=0,
            grid=(N, num_cout_blocks, nt),
            in_specs=[
                pl.BlockSpec((1, c_in, tt), lambda n, co, t: (n, 0, t)),
                pl.BlockSpec((co_blk, L * c_in), lambda n, co, t: (co, 0)),
            ],
            out_specs=pl.BlockSpec((1, co_blk, tt), lambda n, co, t: (n, co, t)),
            scratch_shapes=[
                pltpu.VMEM(win_shape, compute_dtype),
                pltpu.VMEM(rhs_shape, compute_dtype),
            ],
        ),
        compiler_params=pltpu.CompilerParams(
            dimension_semantics=("parallel", "parallel", "arbitrary"),
            vmem_limit_bytes=vmem_limit,
        ),
        cost_estimate=cost,
    )(x_c, w_stack)


# ----------------------------------------------------------------------------
# reference (pure JAX) for verification
# ----------------------------------------------------------------------------
def glm_filter_apply_ref(x, weight, *, conv_groups):
    L = weight.shape[-1]
    x_pad = jnp.pad(x, ((0, 0), (0, 0), (L - 1, 0)))
    return lax.conv_general_dilated(
        x_pad, weight,
        window_strides=(1,),
        padding="VALID",
        dimension_numbers=("NCH", "OIH", "NCH"),
        feature_group_count=conv_groups,
    )


if __name__ == "__main__":
    k1, k2, k3, k4, k5, k6 = jax.random.split(jax.random.PRNGKey(0), 6)

    # ---- config 1: tiny shapes consistent with the module (single time tile)
    L1, G1 = 5, 2
    N1, Ci1, Co1, T1 = 2, 4, 4, 16
    x1 = jax.random.normal(k1, (N1, Ci1, T1), dtype=jnp.float32)
    w1 = 0.1 * jax.random.normal(k2, (Co1, Ci1 // G1, L1), dtype=jnp.float32)

    # exact check with f32 streaming
    y1_f32 = jax.block_until_ready(
        glm_filter_apply(x1, w1, conv_groups=G1, compute_dtype=jnp.float32))
    y1_ref = glm_filter_apply_ref(x1, w1, conv_groups=G1)
    assert y1_f32.shape == (N1, Co1, T1)
    assert jnp.allclose(y1_f32, y1_ref, atol=1e-5, rtol=1e-5)

    # default bf16 streaming (f32 accumulation): compare against the reference on
    # bf16-rounded inputs (products are exact in f32)
    y1_bf = jax.block_until_ready(glm_filter_apply(x1, w1, conv_groups=G1))
    y1_ref_bf = glm_filter_apply_ref(
        x1.astype(jnp.bfloat16).astype(jnp.float32),
        w1.astype(jnp.bfloat16).astype(jnp.float32), conv_groups=G1)
    assert jnp.allclose(y1_bf, y1_ref_bf, atol=1e-3, rtol=1e-3)

    # ---- config 2: exercises the time-tiled halo carry + XLU roll path
    L2, G2 = 5, 2
    N2, Ci2, Co2, T2 = 2, 8, 8, 256
    x2 = jax.random.normal(k3, (N2, Ci2, T2), dtype=jnp.float32)
    w2 = 0.1 * jax.random.normal(k4, (Co2, Ci2 // G2, L2), dtype=jnp.float32)
    y2 = jax.block_until_ready(
        glm_filter_apply(x2, w2, conv_groups=G2, time_tile=128))
    y2_ref_bf = glm_filter_apply_ref(
        x2.astype(jnp.bfloat16).astype(jnp.float32),
        w2.astype(jnp.bfloat16).astype(jnp.float32), conv_groups=G2)
    assert y2.shape == (N2, Co2, T2)
    assert jnp.allclose(y2, y2_ref_bf, atol=1e-3, rtol=1e-3)

    # bf16 output (HBM-traffic saver) on the same data
    y2_bf16out = jax.block_until_ready(
        glm_filter_apply(x2, w2, conv_groups=G2, time_tile=128,
                         out_dtype=jnp.bfloat16))
    assert y2_bf16out.dtype == jnp.bfloat16
    assert jnp.allclose(y2_bf16out.astype(jnp.float32), y2_ref_bf,
                        atol=2e-2, rtol=2e-2)

    # ---- config 3: small batch, C_out split across a second parallel grid axis
    L3, G3 = 3, 4
    N3, Ci3, Co3, T3 = 1, 16, 16, 256
    x3 = jax.random.normal(k5, (N3, Ci3, T3), dtype=jnp.float32)
    w3 = 0.1 * jax.random.normal(k6, (Co3, Ci3 // G3, L3), dtype=jnp.float32)
    y3 = jax.block_until_ready(
        glm_filter_apply(x3, w3, conv_groups=G3, time_tile=128,
                         num_cout_blocks=2))
    y3_ref_bf = glm_filter_apply_ref(
        x3.astype(jnp.bfloat16).astype(jnp.float32),
        w3.astype(jnp.bfloat16).astype(jnp.float32), conv_groups=G3)
    assert y3.shape == (N3, Co3, T3)
    assert jnp.allclose(y3, y3_ref_bf, atol=1e-3, rtol=1e-3)

    print("KERNEL_OK")
</pallas_src>

<mosaic_0001>
module attributes {stable_mosaic.version = 11 : i64} {
  func.func @_glm_filter_kernel(%arg0: i32, %arg1: i32, %arg2: i32, %arg3: memref<1x4x16xf32, #tpu.memory_space<vmem>>, %arg4: memref<4x20xf32, #tpu.memory_space<vmem>>, %arg5: memref<1x4x16xf32, #tpu.memory_space<vmem>>, %arg6: memref<4x144xf32, #tpu.memory_space<vmem>>, %arg7: memref<20x16xf32, #tpu.memory_space<vmem>>) attributes {dimension_semantics = [#tpu.dimension_semantics<parallel>, #tpu.dimension_semantics<parallel>, #tpu.dimension_semantics<arbitrary>], iteration_bounds = array<i64: 2, 1, 1>, scalar_prefetch = 0 : i64, scratch_operands = 2 : i64, tpu.core_type = #tpu.core_type<tc>, window_params = [{transform_indices = @transform_0, window_bounds = array<i64: 1, 4, 16>}, {transform_indices = @transform_1, window_bounds = array<i64: 4, 20>}, {transform_indices = @transform_2, window_bounds = array<i64: 1, 4, 16>}]} {
    %c0 = arith.constant 0 : index
    %c0_0 = arith.constant 0 : index
    %c0_1 = arith.constant 0 : index
    %0 = vector.load %arg3[%c0, %c0_0, %c0_1] : memref<1x4x16xf32, #tpu.memory_space<vmem>>, vector<1x4x16xf32>
    %1 = vector.shape_cast %0 : vector<1x4x16xf32> to vector<4x16xf32>
    %c0_i32 = arith.constant 0 : i32
    %2 = arith.cmpi eq, %arg2, %c0_i32 : i32
    %3 = arith.extui %2 : i1 to i32
    %c0_i32_2 = arith.constant 0 : i32
    %4 = arith.cmpi ne, %3, %c0_i32_2 : i32
    scf.if %4 {
      %cst_19 = arith.constant 0.000000e+00 : f32
      %22 = vector.broadcast %cst_19 : f32 to vector<4x128xf32>
      %c0_20 = arith.constant 0 : index
      %c0_21 = arith.constant 0 : index
      %23 = vector.load %arg6[%c0_20, %c0_21] : memref<4x144xf32, #tpu.memory_space<vmem>>, vector<4x128xf32>
      tpu.vector_store %arg6[%c0_20, %c0_21], %22 {strides = array<i32>} : memref<4x144xf32, #tpu.memory_space<vmem>>, vector<4x128xf32>,
    } else {
    }
    %c0_3 = arith.constant 0 : index
    %c128 = arith.constant 128 : index
    %5 = vector.load %arg6[%c0_3, %c128] : memref<4x144xf32, #tpu.memory_space<vmem>>, vector<4x16xf32>
    tpu.vector_store %arg6[%c0_3, %c128], %1 {strides = array<i32>} : memref<4x144xf32, #tpu.memory_space<vmem>>, vector<4x16xf32>,
    %c0_4 = arith.constant 0 : index
    %c0_5 = arith.constant 0 : index
    %6 = vector.load %arg6[%c0_4, %c0_5] : memref<4x144xf32, #tpu.memory_space<vmem>>, vector<4x144xf32>
    %7 = vector.extract_strided_slice %6 {offsets = [0, 124], sizes = [4, 16], strides = [1, 1]} : vector<4x144xf32> to vector<4x16xf32>
    %c0_6 = arith.constant 0 : index
    %c0_7 = arith.constant 0 : index
    %8 = vector.load %arg7[%c0_6, %c0_7] : memref<20x16xf32, #tpu.memory_space<vmem>>, vector<4x16xf32>
    tpu.vector_store %arg7[%c0_6, %c0_7], %7 {strides = array<i32>} : memref<20x16xf32, #tpu.memory_space<vmem>>, vector<4x16xf32>,
    %9 = vector.extract_strided_slice %6 {offsets = [0, 125], sizes = [4, 16], strides = [1, 1]} : vector<4x144xf32> to vector<4x16xf32>
    %c4 = arith.constant 4 : index
    %c0_8 = arith.constant 0 : index
    %10 = vector.load %arg7[%c4, %c0_8] : memref<20x16xf32, #tpu.memory_space<vmem>>, vector<4x16xf32>
    tpu.vector_store %arg7[%c4, %c0_8], %9 {strides = array<i32>} : memref<20x16xf32, #tpu.memory_space<vmem>>, vector<4x16xf32>,
    %11 = vector.extract_strided_slice %6 {offsets = [0, 126], sizes = [4, 16], strides = [1, 1]} : vector<4x144xf32> to vector<4x16xf32>
    %c8 = arith.constant 8 : index
    %c0_9 = arith.constant 0 : index
    %12 = vector.load %arg7[%c8, %c0_9] : memref<20x16xf32, #tpu.memory_space<vmem>>, vector<4x16xf32>
    tpu.vector_store %arg7[%c8, %c0_9], %11 {strides = array<i32>} : memref<20x16xf32, #tpu.memory_space<vmem>>, vector<4x16xf32>,
    %13 = vector.extract_strided_slice %6 {offsets = [0, 127], sizes = [4, 16], strides = [1, 1]} : vector<4x144xf32> to vector<4x16xf32>
    %c12 = arith.constant 12 : index
    %c0_10 = arith.constant 0 : index
    %14 = vector.load %arg7[%c12, %c0_10] : memref<20x16xf32, #tpu.memory_space<vmem>>, vector<4x16xf32>
    tpu.vector_store %arg7[%c12, %c0_10], %13 {strides = array<i32>} : memref<20x16xf32, #tpu.memory_space<vmem>>, vector<4x16xf32>,
    %c16 = arith.constant 16 : index
    %c0_11 = arith.constant 0 : index
    %15 = vector.load %arg7[%c16, %c0_11] : memref<20x16xf32, #tpu.memory_space<vmem>>, vector<4x16xf32>
    tpu.vector_store %arg7[%c16, %c0_11], %1 {strides = array<i32>} : memref<20x16xf32, #tpu.memory_space<vmem>>, vector<4x16xf32>,
    %c0_12 = arith.constant 0 : index
    %c0_13 = arith.constant 0 : index
    %16 = vector.load %arg7[%c0_12, %c0_13] : memref<20x16xf32, #tpu.memory_space<vmem>>, vector<20x16xf32>
    %c0_14 = arith.constant 0 : index
    %c0_15 = arith.constant 0 : index
    %17 = vector.load %arg4[%c0_14, %c0_15] : memref<4x20xf32, #tpu.memory_space<vmem>>, vector<4x20xf32>
    %cst = arith.constant dense<0.000000e+00> : vector<4x16xf32>
    %18 = tpu.matmul %17, %16, %cst {dimension_numbers = #tpu.dot_dimension_numbers<[1], [0], [0], [1], [0, 0, 1, 1], [], []>} : vector<4x20xf32>, vector<20x16xf32>, vector<4x16xf32> -> vector<4x16xf32>
    %c0_16 = arith.constant 0 : index
    %c0_17 = arith.constant 0 : index
    %c0_18 = arith.constant 0 : index
    %19 = vector.load %arg5[%c0_16, %c0_17, %c0_18] : memref<1x4x16xf32, #tpu.memory_space<vmem>>, vector<1x4x16xf32>
    %20 = vector.shape_cast %19 : vector<1x4x16xf32> to vector<4x16xf32>
    %21 = vector.shape_cast %18 : vector<4x16xf32> to vector<1x4x16xf32>
    tpu.vector_store %arg5[%c0_16, %c0_17, %c0_18], %21 {strides = array<i32>} : memref<1x4x16xf32, #tpu.memory_space<vmem>>, vector<1x4x16xf32>,
    return
  }
  func.func @transform_0(%arg0: i32, %arg1: i32, %arg2: i32) -> (i32, i32, i32) {
    %c0_i32 = arith.constant 0 : i32
    %c0_i32_0 = arith.constant 0 : i32
    return %arg0, %c0_i32, %arg2 : i32, i32, i32
  }
  func.func @transform_1(%arg0: i32, %arg1: i32, %arg2: i32) -> (i32, i32) {
    %c0_i32 = arith.constant 0 : i32
    %c0_i32_0 = arith.constant 0 : i32
    return %arg1, %c0_i32 : i32, i32
  }
  func.func @transform_2(%arg0: i32, %arg1: i32, %arg2: i32) -> (i32, i32, i32) {
    %c0_i32 = arith.constant 0 : i32
    return %arg0, %arg1, %arg2 : i32, i32, i32
  }
}

</mosaic_0001>

<llo_original>
// kernel: tpu_custom_call.1
$region0: #{tpu_custom_call.1}
  #allocation0 [shape = 'u32[]', space=smem, size = 0x4, offset = 0x4, fixed_abs, tag = 'smem constant byte address 0x4 - core index']
  #allocation1 [shape = 'u32[144,128]{1,0:T(1,128)}', space=vmem, size = 0x12000, scoped, tag = 'internal scratch']
  #allocation2 [shape = 'f32[4,144]{1,0:T(4,128)}', space=vmem, size = 0x1000, scoped, tag = 'scratch operand']
  #allocation3 [shape = 'f32[20,16]{1,0:T(8,128)}', space=vmem, size = 0x3000, scoped, tag = 'scratch operand']
  %s0 = inlined_call_operand.hbm [shape: f32[2,4,16], index: 0, kind: input, shape index: {}]
  %s1 = inlined_call_operand.hbm [shape: f32[4,20], index: 1, kind: input, shape index: {}]
  %s2 = inlined_call_operand.hbm [shape: f32[2,4,16], index: 2, kind: output, shape index: {}]
  %s3 = sld [smem:[#allocation0]]
  $region53: #{tpu_custom_call.1} parent=0
    _
  %s5 = ssub.s32 1, %s3
  %s6 = scalar_select 0, %s5, %s3
  $region1: #{tpu_custom_call.1} parent=0
    #allocation4 [shape = 'u8[4096]{0}', space=vmem, size = 0x1000, scoped, tag = 'input window, operand 0']
    #allocation5 [shape = 's32[2]{0}', space=sflag, size = 0x8, scoped, tag = 'scoped memory for tpu_custom_call.1']
    #allocation6 [shape = 's32[2]{0}', space=sflag, size = 0x8, scoped, tag = 'scoped memory for tpu_custom_call.1']
    #allocation7 [shape = 'u8[2048]{0}', space=vmem, size = 0x800, scoped, tag = 'input window, operand 1, single buffered']
    #allocation8 [shape = 's32[1]{0}', space=sflag, size = 0x4, scoped, tag = 'scoped memory for tpu_custom_call.1']
    #allocation9 [shape = 'u8[4096]{0}', space=vmem, size = 0x1000, scoped, tag = 'output window, operand 0']
    %7 = vsyncpa [#allocation5], 0
    %s8 = scalar_lea.sflag [#allocation5], 1
    %9 = vsyncpa %s8, 0
    %10 = vsyncpa [#allocation8], 0
    %11 = vsyncpa [#allocation6], 0
    %s12 = scalar_lea.sflag [#allocation6], 1
    %13 = vsyncpa %s12, 0
    loop: start=0, step=1, limit=4
    $region2: #{tpu_custom_call.1} parent=1 // loop_pre_header
      _
    $region3: #{tpu_custom_call.1} parent=1 // loop_header
      %s15 = sphi 0, %s19
      %p16 = scmp.ge.s32.totalorder %s15, 4
      %s22 = sphi 0, %s41
      %s23 = sphi 0, %s37
      %s24 = sphi 0, %s33
      %s25 = sphi 0, %s22
      %s26 = sphi 0, %s23
      %s27 = sphi 0, %s24
      %s28 = sphi 0, %s25
      %s29 = sphi 0, %s26
      %s30 = sphi 0, %s27
      %s46 = sphi 0, %s48
      %s49 = sphi 0, %s46
      %s50 = sphi 0, %s49
      %s66 = sphi 0, %s50
      %s72 = sphi 0, %s74
      %s75 = sphi 0, %s72
      %s76 = sphi 0, %s75
      %s92 = sphi 0, %s76
      %s102 = sphi 0, %s104
      %s105 = sphi 0, %s102
      %s106 = sphi 0, %s105
      %s122 = sphi 0, %s106
    $region4: #{tpu_custom_call.1} parent=1 // loop_header_branch
      %18 = sbr.rel (%p16) target = $region8
    $region5: #{tpu_custom_call.1} parent=1 // loop_body
      %s20 = ssub.s32 %s15, 1
      %s21 = ssub.s32 %s15, 2
      %s31 = sadd.s32 1, %s24
      %p32 = scmp.ge.s32.totalorder %s31, 1
      %s33 = scalar_select %p32, 0, %s31
      %s34 = sadd.s32 1, %s23
      %s35 = scalar_select %p32, %s34, %s23
      %p36 = scmp.ge.s32.totalorder %s35, 1
      %s37 = scalar_select %p36, 0, %s35
      %s38 = sadd.s32 1, %s22
      %s39 = scalar_select %p36, %s38, %s22
      %p40 = scmp.ge.s32.totalorder %s39, 2
      %s41 = scalar_select %p40, 0, %s39
      %s42 = ssub.s32 %s22, %s41
      %s43 = ssub.s32 %s24, %s33
      %s44 = sor.u32 %s42, %s43
      %p45 = scmp.eq.s32.totalorder %s44, 0
      %s47 = sadd.s32 %s46, 1
      %s48 = scalar_select %p45, %s46, %s47
      %p51 = pneg %p45
      %p52 = scmp.eq.s32.totalorder %s15, 1
      %p53 = por %p51, %p52
      %p54 = scmp.ne.s32.totalorder %s46, %s49
      %p55 = scmp.eq.s32.totalorder %s15, 0
      %p56 = por %p54, %p55
      %p57 = scmp.ne.s32.totalorder %s46, %s49
      %p58 = scmp.eq.s32.totalorder %s20, 1
      %p59 = por %p57, %p58
      %p60 = scmp.ne.s32.totalorder %s49, %s50
      %p61 = scmp.eq.s32.totalorder %s20, 0
      %p62 = por %p60, %p61
      %p63 = scmp.ne.s32.totalorder %s49, %s50
      %p64 = scmp.eq.s32.totalorder %s21, 1
      %p65 = por %p63, %p64
      %p67 = scmp.ne.s32.totalorder %s50, %s66
      %p68 = scmp.eq.s32.totalorder %s21, 0
      %p69 = por %p67, %p68
      %s70 = ssub.s32 %s23, %s37
      %p71 = scmp.eq.s32.totalorder %s70, 0
      %s73 = sadd.s32 %s72, 1
      %s74 = scalar_select %p71, %s72, %s73
      %p77 = pneg %p71
      %p78 = scmp.eq.s32.totalorder %s15, 1
      %p79 = por %p77, %p78
      %p80 = scmp.ne.s32.totalorder %s72, %s75
      %p81 = scmp.eq.s32.totalorder %s15, 0
      %p82 = por %p80, %p81
      %p83 = scmp.ne.s32.totalorder %s72, %s75
      %p84 = scmp.eq.s32.totalorder %s20, 1
      %p85 = por %p83, %p84
      %p86 = scmp.ne.s32.totalorder %s75, %s76
      %p87 = scmp.eq.s32.totalorder %s20, 0
      %p88 = por %p86, %p87
      %p89 = scmp.ne.s32.totalorder %s75, %s76
      %p90 = scmp.eq.s32.totalorder %s21, 1
      %p91 = por %p89, %p90
      %p93 = scmp.ne.s32.totalorder %s76, %s92
      %p94 = scmp.eq.s32.totalorder %s21, 0
      %p95 = por %p93, %p94
      %s96 = ssub.s32 %s22, %s41
      %s97 = ssub.s32 %s23, %s37
      %s98 = sor.u32 %s96, %s97
      %s99 = ssub.s32 %s24, %s33
      %s100 = sor.u32 %s98, %s99
      %p101 = scmp.eq.s32.totalorder %s100, 0
      %s103 = sadd.s32 %s102, 1
      %s104 = scalar_select %p101, %s102, %s103
      %p107 = pneg %p101
      %p108 = scmp.eq.s32.totalorder %s15, 1
      %p109 = por %p107, %p108
      %p110 = scmp.ne.s32.totalorder %s102, %s105
      %p111 = scmp.eq.s32.totalorder %s15, 0
      %p112 = por %p110, %p111
      %p113 = scmp.ne.s32.totalorder %s102, %s105
      %p114 = scmp.eq.s32.totalorder %s20, 1
      %p115 = por %p113, %p114
      %p116 = scmp.ne.s32.totalorder %s105, %s106
      %p117 = scmp.eq.s32.totalorder %s20, 0
      %p118 = por %p116, %p117
      %p119 = scmp.ne.s32.totalorder %s105, %s106
      %p120 = scmp.eq.s32.totalorder %s21, 1
      %p121 = por %p119, %p120
      %p123 = scmp.ne.s32.totalorder %s106, %s122
      %p124 = scmp.eq.s32.totalorder %s21, 0
      %p125 = por %p123, %p124
      %p126 = scmp.le.s32.totalorder 1, %s15
      %p127 = scmp.lt.s32.totalorder %s15, 3
      %p128 = pnand %p126, %p127
      %p129 = pneg %p128
      // Predicated region
      $region9: #{tpu_custom_call.1} parent=5 // pred_check
        _
      $region10: #{tpu_custom_call.1} parent=5 // pred_check_branch
        %131 = sbr.rel (%p128) target = $region12
      $region11: #{tpu_custom_call.1} parent=5 // pred_region
        %s132 = ssub.s32 %s15, 1
        // Predicated region
        $region13: #{tpu_custom_call.1} parent=11 // pred_check
          %p133 = pneg %p88
        $region14: #{tpu_custom_call.1} parent=11 // pred_check_branch
          %135 = sbr.rel (%p133) target = $region16
        $region15: #{tpu_custom_call.1} parent=11 // pred_region
          %s137 = ssub.s32 64, 64
          %138 = vsyncadd [#allocation8], %s137
          %s139 = smul.addr %s26, 64
          %s140 = scalar_lea.hbm %s1, %s139
          %s142 = sshll.u32 [#allocation7], 4
          %s143 = int_to_ptr.vmem [resolvable:$true] %s142
          %145 = dma.hbm_to_vmem [thread:$0]  %s140, 64, %s143, [#allocation8]
        $region16: #{tpu_custom_call.1} parent=11 // pred_fallthru
          _
      $region12: #{tpu_custom_call.1} parent=5 // pred_fallthru
        _
      %p146 = scmp.lt.s32.totalorder %s15, 2
      // Predicated region
      $region17: #{tpu_custom_call.1} parent=5 // pred_check
        %p147 = pneg %p146
      $region18: #{tpu_custom_call.1} parent=5 // pred_check_branch
        %149 = sbr.rel (%p147) target = $region20
      $region19: #{tpu_custom_call.1} parent=5 // pred_region
        // Predicated region
        $region21: #{tpu_custom_call.1} parent=19 // pred_check
          %p150 = pneg %p56
        $region22: #{tpu_custom_call.1} parent=19 // pred_check_branch
          %152 = sbr.rel (%p150) target = $region24
        $region23: #{tpu_custom_call.1} parent=19 // pred_region
          %s153 = sand.u32 %s46, 1
          %s154 = scalar_lea.sflag [#allocation5], %s153
          %s155 = sand.u32 %s46, 1
          %s156 = smul.addr %s155, 4
          %s157 = scalar_lea.vmem [#allocation4], %s156
          %s159 = ssub.s32 64, 64
          %160 = vsyncadd %s154, %s159
          %s161 = sadd.s32 %s24, %s22
          %s162 = smul.addr %s161, 64
          %s163 = scalar_lea.hbm %s0, %s162
          %s165 = sshll.u32 %s157, 4
          %s166 = int_to_ptr.vmem [resolvable:$true] %s165
          %168 = dma.hbm_to_vmem [thread:$0]  %s163, 64, %s166, %s154
        $region24: #{tpu_custom_call.1} parent=19 // pred_fallthru
          _
      $region20: #{tpu_custom_call.1} parent=5 // pred_fallthru
        _
      %p169 = scmp.le.s32.totalorder 1, %s15
      %p170 = scmp.lt.s32.totalorder %s15, 3
      %p171 = pnand %p169, %p170
      %p172 = pneg %p171
      // Predicated region
      $region25: #{tpu_custom_call.1} parent=5 // pred_check
        _
      $region26: #{tpu_custom_call.1} parent=5 // pred_check_branch
        %174 = sbr.rel (%p171) target = $region28
      $region27: #{tpu_custom_call.1} parent=5 // pred_region
        %s175 = ssub.s32 %s15, 1
        %s176 = sand.u32 %s49, 1
        %s177 = scalar_lea.sflag [#allocation5], %s176
        %s178 = sand.u32 %s49, 1
        %s179 = smul.addr %s178, 4
        %s180 = scalar_lea.vmem [#allocation4], %s179
        // Predicated region
        $region29: #{tpu_custom_call.1} parent=27 // pred_check
          %p181 = pneg %p62
        $region30: #{tpu_custom_call.1} parent=27 // pred_check_branch
          %183 = sbr.rel (%p181) target = $region32
        $region31: #{tpu_custom_call.1} parent=27 // pred_region
          %184 = dma.done %s177, 64
        $region32: #{tpu_custom_call.1} parent=27 // pred_fallthru
          _
        // Predicated region
        $region33: #{tpu_custom_call.1} parent=27 // pred_check
          %p185 = pneg %p88
        $region34: #{tpu_custom_call.1} parent=27 // pred_check_branch
          %187 = sbr.rel (%p185) target = $region36
        $region35: #{tpu_custom_call.1} parent=27 // pred_region
          %188 = dma.done [#allocation8], 64
        $region36: #{tpu_custom_call.1} parent=27 // pred_fallthru
          _
        %s189 = sand.u32 %s49, 1
        %s190 = scalar_lea.sflag [#allocation5], %s189
        %s191 = sand.u32 %s49, 1
        %s192 = smul.addr %s191, 4
        %s193 = scalar_lea.vmem [#allocation4], %s192
        %p194 = pneg %p62
        %p195 = pneg %p59
        %p196 = pneg %p88
        %p197 = pneg %p85
        %p198 = pneg %p118
        %p199 = pneg %p115
        %s200 = sand.u32 %s105, 1
        %s201 = scalar_lea.sflag [#allocation6], %s200
        %s202 = sand.u32 %s105, 1
        %s203 = smul.addr %s202, 4
        %s204 = scalar_lea.vmem [#allocation9], %s203
        %v205 = vld [vmem:[%s180] sm:$0xf]
        %p206 = scmp.eq.s32.totalorder %s27, 0
        // Predicated region
        $region37: #{tpu_custom_call.1} parent=27 // pred_check
          %p207 = pneg %p206
        $region38: #{tpu_custom_call.1} parent=27 // pred_check_branch
          %209 = sbr.rel (%p207) target = $region40
        $region39: #{tpu_custom_call.1} parent=27 // pred_region
          %210 = vst [vmem:[#allocation2] sm:$0xf] 0.0
        $region40: #{tpu_custom_call.1} parent=27 // pred_fallthru
          _
        %vm211 = vcmask 125952
        %212 = vst.msk [vmem:[#allocation2 + $0x4] sm:$0xf] %vm211, %v205
        %v213 = vld [vmem:[#allocation2] sm:$0xff]
        %v215 = vcombine.high %v213, %v213
        %216 = vrot.lane.b32.xlu0 %v213, 4
        %v217 = vpop.permute.xlu0 %216
        %218 = vrot.lane.b32.xlu0 %v215, 4
        %v219 = vpop.permute.xlu0 %218
        %vm220 = vcmask 31744
        %v221 = vsel %vm220, %v217, %v219
        %223 = vst.msk [vmem:[#allocation3] sm:$0xf] %vm211, %v221
        %224 = vrot.lane.b32.xlu0 %v213, 3
        %v225 = vpop.permute.xlu0 %224
        %226 = vrot.lane.b32.xlu0 %v215, 3
        %v227 = vpop.permute.xlu0 %226
        %vm228 = vcmask 23552
        %v229 = vsel %vm228, %v225, %v227
        %231 = vst.msk [vmem:[#allocation3 + $0x4] sm:$0xf] %vm211, %v229
        %232 = vrot.lane.b32.xlu0 %v213, 2
        %v233 = vpop.permute.xlu0 %232
        %234 = vrot.lane.b32.xlu0 %v215, 2
        %v235 = vpop.permute.xlu0 %234
        %vm236 = vcmask 15360
        %v237 = vsel %vm236, %v233, %v235
        %239 = vst.msk [vmem:[#allocation3 + $0x8] sm:$0xf] %vm211, %v237
        %240 = vrot.lane.b32.xlu0 %v213, 1
        %v241 = vpop.permute.xlu0 %240
        %242 = vrot.lane.b32.xlu0 %v215, 1
        %v243 = vpop.permute.xlu0 %242
        %vm244 = vcmask 7168
        %v245 = vsel %vm244, %v241, %v243
        %247 = vst.msk [vmem:[#allocation3 + $0xc] sm:$0xf] %vm211, %v245
        %248 = vst.msk [vmem:[#allocation3 + $0x10] sm:$0xf] %vm211, %v205
        %v249 = vld [vmem:[#allocation3] sm:$0xff]
        %v250 = vld [vmem:[#allocation3 + $0x8] sm:$0xff]
        %v251 = vld [vmem:[#allocation3 + $0x10] sm:$0xf]
        %v252 = vld [vmem:[#allocation7] sm:$0xf]
        %vm253 = vcmask 162816
        %v255 = vsel %vm253, %v252, 0
        %vm257 = vcmask 1043456
        %v259 = vsel %vm257, %v251, 0
        %261 = vmatprep.subr.mxu0 0.0
        %262 = vmatpush1.msra.mxu0 %v249
        %263 = vmatprep.subr.mxu0 0.0
        %264 = vmatpush1.msra.mxu0 %v250
        %265 = vmatprep.subr.mxu0 0.0
        %266 = vmatpush1.msra.mxu0 %v259
        %267 = vmatprep.subr.mxu0 0.0
        %268 = vmatpush1.msra.mxu0 0.0
        %269 = vmatprep.subr.mxu0 0.0
        %270 = vmatpush1.msra.mxu0 0.0
        %271 = vmatprep.subr.mxu0 0.0
        %272 = vmatpush1.msra.mxu0 0.0
        %273 = vmatprep.subr.mxu0 0.0
        %274 = vmatpush1.msra.mxu0 0.0
        %275 = vmatprep.subr.mxu0 0.0
        %276 = vmatpush1.msra.mxu0 0.0
        %277 = vmatprep.subr.mxu0 0.0
        %278 = vmatpush1.msra.mxu0 0.0
        %279 = vmatprep.subr.mxu0 0.0
        %280 = vmatpush1.msra.mxu0 0.0
        %281 = vmatprep.subr.mxu0 0.0
        %282 = vmatpush1.msra.mxu0 0.0
        %283 = vmatprep.subr.mxu0 0.0
        %284 = vmatpush1.msra.mxu0 0.0
        %285 = vmatprep.subr.mxu0 0.0
        %286 = vmatpush1.msra.mxu0 0.0
        %287 = vmatprep.subr.mxu0 0.0
        %288 = vmatpush1.msra.mxu0 0.0
        %289 = vmatprep.subr.mxu0 0.0
        %290 = vmatpush1.msra.mxu0 0.0
        %291 = vmatprep.subr.mxu0 0.0
        %292 = vmatpush1.msra.mxu0 0.0
        %293 = vmatprep.subr.mxu0 0.0
        %294 = vmatpush1.msra.mxu0 0.0
        %295 = vmatprep.subr.mxu0 0.0
        %296 = vmatpush1.msra.mxu0 0.0
        %297 = vmatprep.subr.mxu0 0.0
        %298 = vmatpush1.msra.mxu0 0.0
        %299 = vmatprep.subr.mxu0 0.0
        %300 = vmatpush1.msra.mxu0 0.0
        %301 = vmatprep.subr.mxu0 0.0
        %302 = vmatpush1.msra.mxu0 0.0
        %303 = vmatprep.subr.mxu0 0.0
        %304 = vmatpush1.msra.mxu0 0.0
        %305 = vmatprep.subr.mxu0 0.0
        %306 = vmatpush1.msra.mxu0 0.0
        %307 = vmatprep.subr.mxu0 0.0
        %308 = vmatpush1.msra.mxu0 0.0
        %309 = vmatprep.subr.mxu0 0.0
        %310 = vmatpush1.msra.mxu0 0.0
        %311 = vmatprep.subr.mxu0 0.0
        %312 = vmatpush1.msra.mxu0 0.0
        %313 = vmatprep.subr.mxu0 0.0
        %314 = vmatpush1.msra.mxu0 0.0
        %315 = vmatprep.subr.mxu0 0.0
        %316 = vmatpush1.msra.mxu0 0.0
        %317 = vmatprep.subr.mxu0 0.0
        %318 = vmatpush1.msra.mxu0 0.0
        %319 = vmatprep.subr.mxu0 0.0
        %320 = vmatpush1.msra.mxu0 0.0
        %321 = vmatprep.subr.mxu0 0.0
        %322 = vmatpush1.msra.mxu0 0.0
        %323 = vmatprep.subr.mxu0 0.0
        %324 = vmatpush1.msra.mxu0 0.0
        %325 = vmatprep.mubr.f32.mxu0 0.0
        %326 = vmatmul.mubr.f32.gmra.mrb[0].mxu0 %v255
        %v327 = vpop.f32.mrb[0].mxu0
        %v328 = vadd.f32 0.0, %v327
        %v329 = vpop.f32.mrb[0].mxu0
        %330 = vdwg.mxu0
        %331 = vst.msk [vmem:[%s204] sm:$0xf] %vm211, %v328
        %s332 = sand.u32 %s105, 1
        %s333 = scalar_lea.sflag [#allocation6], %s332
        %s334 = sand.u32 %s105, 1
        %s335 = smul.addr %s334, 4
        %s336 = scalar_lea.vmem [#allocation9], %s335
        // Predicated region
        $region41: #{tpu_custom_call.1} parent=27 // pred_check
          %p337 = pneg %p115
        $region42: #{tpu_custom_call.1} parent=27 // pred_check_branch
          %339 = sbr.rel (%p337) target = $region44
        $region43: #{tpu_custom_call.1} parent=27 // pred_region
          %s341 = ssub.s32 64, 64
          %342 = vsyncadd %s333, %s341
          %s343 = sadd.s32 %s27, %s26
          %s344 = sadd.s32 %s343, %s25
          %s345 = smul.addr %s344, 64
          %s346 = scalar_lea.hbm %s2, %s345
          %s348 = sshll.u32 %s336, 4
          %s349 = int_to_ptr.vmem [resolvable:$true] %s348
          %351 = dma.vmem_to_hbm [thread:$0]  %s349, 64, %s346, %s333
        $region44: #{tpu_custom_call.1} parent=27 // pred_fallthru
          _
      $region28: #{tpu_custom_call.1} parent=5 // pred_fallthru
        _
      %p352 = scmp.le.s32.totalorder 2, %s15
      // Predicated region
      $region45: #{tpu_custom_call.1} parent=5 // pred_check
        %p353 = pneg %p352
      $region46: #{tpu_custom_call.1} parent=5 // pred_check_branch
        %355 = sbr.rel (%p353) target = $region48
      $region47: #{tpu_custom_call.1} parent=5 // pred_region
        %s356 = ssub.s32 %s15, 2
        // Predicated region
        $region49: #{tpu_custom_call.1} parent=47 // pred_check
          %p357 = pneg %p121
        $region50: #{tpu_custom_call.1} parent=47 // pred_check_branch
          %359 = sbr.rel (%p357) target = $region52
        $region51: #{tpu_custom_call.1} parent=47 // pred_region
          %s360 = sand.u32 %s106, 1
          %s361 = scalar_lea.sflag [#allocation6], %s360
          %s362 = sand.u32 %s106, 1
          %s363 = smul.addr %s362, 4
          %s364 = scalar_lea.vmem [#allocation9], %s363
          %365 = dma.done %s361, 64
        $region52: #{tpu_custom_call.1} parent=47 // pred_fallthru
          _
      $region48: #{tpu_custom_call.1} parent=5 // pred_fallthru
        _
    $region6: #{tpu_custom_call.1} parent=1 // loop_footer
      %s19 = sadd.s32 1, %s15
    $region7: #{tpu_custom_call.1} parent=1 // loop_footer_branch
      %14 = sbr.rel target = $region3
    $region8: #{tpu_custom_call.1} parent=1 // loop_exit
      _
    %366 = vsyncpa [#allocation5], 1
    %s367 = scalar_lea.sflag [#allocation5], 1
    %368 = vsyncpa %s367, 1
    %369 = vsyncpa [#allocation8], 1
    %370 = vsyncpa [#allocation6], 1
    %s371 = scalar_lea.sflag [#allocation6], 1
    %372 = vsyncpa %s371, 1

</llo_original>
